<compile_context>
chip_gen: v6e
topology: v6e:2x2x1
jax: 0.10.0
libtpu: 0.0.40
codegen_flags: <defaults>
</compile_context>

<pallas_src>
import jax
import jax.numpy as jnp
from jax.experimental import pallas as pl
from jax.experimental.pallas import tpu as pltpu

BN_EPS = 1e-5


def _round_up(x, m):
    return (x + m - 1) // m * m


def matmul_stats_kernel(p_ref, w_ref, y_ref, sum_ref, sq_ref):
    """Phase 1: Y = P @ W (MXU, f32 accum) + per-channel sum / sumsq.

    Grid = (Fout tiles [parallel], M tiles [arbitrary]); the stats accumulators
    are grid-resident over the (last) M axis and re-initialized per Fout tile.
    """
    i = pl.program_id(1)                       # M axis (innermost, "arbitrary")
    y = jnp.dot(p_ref[...], w_ref[...], preferred_element_type=jnp.float32)
    y_ref[...] = y.astype(y_ref.dtype)         # bf16 staging of the intermediate

    @pl.when(i == 0)
    def _():
        sum_ref[...] = jnp.zeros_like(sum_ref)
        sq_ref[...] = jnp.zeros_like(sq_ref)

    sum_ref[...] += jnp.sum(y, axis=0, keepdims=True)
    sq_ref[...] += jnp.sum(y * y, axis=0, keepdims=True)


def bn_relu_transpose_kernel(y_ref, scale_ref, shift_ref, o_ref):
    """Phase 2: y*scale + shift, ReLU, tile transpose to channel-major layout."""
    y = y_ref[...].astype(jnp.float32)                       # (tm, Fp), f32 VPU math
    z = jnp.maximum(y * scale_ref[...] + shift_ref[...], 0.0)
    # (tm, Fp) -> (Fp, tm) on the XLU; store is lane-dense (tm multiple of 128).
    o_ref[...] = z.T.reshape(o_ref.shape).astype(o_ref.dtype)


def _im2col_nchw(x, k, stride):
    """x: [B, Fin, H, W] -> bf16 patches [B, Ho*Wo, Fin*k*k] (cin-major, kh, kw)."""
    B, Fin, H, W = x.shape
    Ho = (H - k) // stride + 1
    Wo = (W - k) // stride + 1
    xb = x.astype(jnp.bfloat16)                # cast fused into patch build
    cols = []
    for kh in range(k):
        for kw in range(k):
            cols.append(xb[:, :, kh:kh + stride * Ho:stride, kw:kw + stride * Wo:stride])
    patches = jnp.stack(cols, axis=2)                          # [B, Fin, k*k, Ho, Wo]
    patches = patches.transpose(0, 3, 4, 1, 2).reshape(B, Ho * Wo, Fin * k * k)
    return patches, Ho, Wo


def conv2dbr_forward(x, weight, bias, gamma, beta, *, kernel_size, stride=1, tm=512):
    """Pallas implementation of conv2dbr.forward.

    x:      [B, Fin, H, W]  (NCHW, float32)
    weight: [Fout, Fin, k, k]
    bias, gamma, beta: [Fout]
    returns [B, Fout, Ho, Wo]  (float32, NCHW)
    """
    B, Fin, H, W = x.shape
    Fout = weight.shape[0]
    k = kernel_size

    # Conv bias is a per-channel constant before training-mode BatchNorm and
    # cancels exactly in (y - mean); intentionally unused.
    del bias

    patches, Ho, Wo = _im2col_nchw(x, k, stride)               # [B, S, K] bf16
    S = Ho * Wo
    K = patches.shape[-1]
    M = B * S                                                  # true count for stats

    Kp = _round_up(K, 128)
    Fp = _round_up(Fout, 128)        # NOTE: Fout<=128 underfills the 256-wide MXU
    Sp = _round_up(S, tm)            # per-batch spatial padding (M tiles stay in-batch)
    Mp = B * Sp
    n_m_tiles = Mp // tm
    tn = 256 if Fp % 256 == 0 else 128
    n_n_tiles = Fp // tn
    s_tiles_per_b = Sp // tm

    # Single fused zero-pad in bf16 (no extra f32 materialization of P).
    p_pad = jnp.pad(patches, ((0, 0), (0, Sp - S), (0, Kp - K))).reshape(Mp, Kp)
    w_pad = jnp.pad(weight.reshape(Fout, K).T.astype(jnp.bfloat16),
                    ((0, Kp - K), (0, Fp - Fout)))
    g_pad = jnp.pad(gamma.astype(jnp.float32), (0, Fp - Fout)).reshape(1, Fp)
    b_pad = jnp.pad(beta.astype(jnp.float32), (0, Fp - Fout)).reshape(1, Fp)

    # ---- Phase 1: tiled matmul + global per-channel sum / sum-of-squares ----
    # pipeline_mode=pl.Buffered(3) on the P spec could further hide DMA latency
    # in the small-K HBM-bound regime; left at the default depth for portability.
    y_pad, col_sum, col_sq = pl.pallas_call(
        matmul_stats_kernel,
        out_shape=(
            jax.ShapeDtypeStruct((Mp, Fp), jnp.bfloat16),      # Y intermediate (bf16)
            jax.ShapeDtypeStruct((1, Fp), jnp.float32),        # per-channel sum
            jax.ShapeDtypeStruct((1, Fp), jnp.float32),        # per-channel sumsq
        ),
        grid=(n_n_tiles, n_m_tiles),
        in_specs=[
            pl.BlockSpec((tm, Kp), lambda j, i: (i, 0)),
            pl.BlockSpec((Kp, tn), lambda j, i: (0, j)),       # W resident over M tiles
        ],
        out_specs=(
            pl.BlockSpec((tm, tn), lambda j, i: (i, j)),
            pl.BlockSpec((1, tn), lambda j, i: (0, j)),        # grid-resident accumulator
            pl.BlockSpec((1, tn), lambda j, i: (0, j)),        # grid-resident accumulator
        ),
        compiler_params=pltpu.CompilerParams(
            dimension_semantics=("parallel", "arbitrary")),    # Fout axis shards TCs
    )(p_pad, w_pad)

    # Hoisted BN affine: tiny (1, Fp) XLA ops, divide by the TRUE element count.
    mean = col_sum * (1.0 / M)
    var = jnp.maximum(col_sq * (1.0 / M) - mean * mean, 0.0)
    scale = g_pad * jax.lax.rsqrt(var + BN_EPS)
    shift = b_pad - mean * scale

    # ---- Phase 2: normalize + ReLU + direct channel-major (NCHW) store ----
    # TODO(synk): make the output bf16 if downstream accepts reduced precision
    # (halves the dominant Phase 2 store stream); kept f32 to match the module.
    out_pad = pl.pallas_call(
        bn_relu_transpose_kernel,
        out_shape=jax.ShapeDtypeStruct((B, Fp, Sp), jnp.float32),
        grid=(n_m_tiles,),
        in_specs=[
            pl.BlockSpec((tm, Fp), lambda i: (i, 0)),
            pl.BlockSpec((1, Fp), lambda i: (0, 0)),
            pl.BlockSpec((1, Fp), lambda i: (0, 0)),
        ],
        out_specs=pl.BlockSpec(
            (1, Fp, tm),
            lambda i: (i // s_tiles_per_b, 0, i % s_tiles_per_b)),
        compiler_params=pltpu.CompilerParams(
            dimension_semantics=("parallel",)),                # shards across TCs
    )(y_pad, scale, shift)

    # No XLA transpose: the kernel wrote channel-major. Slice is a no-op view
    # when Fout % 128 == 0 and Ho*Wo % tm == 0.
    return out_pad[:, :Fout, :S].reshape(B, Fout, Ho, Wo)


def _reference(x, weight, bias, gamma, beta, *, kernel_size, stride=1):
    """Pure-JAX f32 reference (NCHW conv + training-mode BN + ReLU)."""
    y = jax.lax.conv_general_dilated(
        x, weight, window_strides=(stride, stride), padding="VALID",
        dimension_numbers=("NCHW", "OIHW", "NCHW"))
    y = y + bias.reshape(1, -1, 1, 1)
    mean = jnp.mean(y, axis=(0, 2, 3), keepdims=True)
    var = jnp.mean((y - mean) ** 2, axis=(0, 2, 3), keepdims=True)
    y = (y - mean) * jax.lax.rsqrt(var + BN_EPS)
    y = y * gamma.reshape(1, -1, 1, 1) + beta.reshape(1, -1, 1, 1)
    return jnp.maximum(y, 0.0)


if __name__ == "__main__":
    B, Fin, Fout, H, W = 2, 4, 8, 16, 16
    kernel_size, stride = 3, 1

    key = jax.random.PRNGKey(0)
    kx, kw, kb, kg, kbeta = jax.random.split(key, 5)

    x = jax.random.normal(kx, (B, Fin, H, W), dtype=jnp.float32)
    fan_in = Fin * kernel_size * kernel_size
    weight = jax.random.uniform(kw, (Fout, Fin, kernel_size, kernel_size),
                                minval=-1.0, maxval=1.0,
                                dtype=jnp.float32) / jnp.sqrt(fan_in)
    bias = jax.random.uniform(kb, (Fout,), minval=-1.0, maxval=1.0,
                              dtype=jnp.float32) / jnp.sqrt(fan_in)
    # Non-trivial BN affine so gamma/beta paths are actually exercised.
    gamma = 1.0 + 0.1 * jax.random.normal(kg, (Fout,), dtype=jnp.float32)
    beta = 0.1 * jax.random.normal(kbeta, (Fout,), dtype=jnp.float32)

    out = conv2dbr_forward(x, weight, bias, gamma, beta,
                           kernel_size=kernel_size, stride=stride)
    out = jax.block_until_ready(out)

    ref = _reference(x, weight, bias, gamma, beta,
                     kernel_size=kernel_size, stride=stride)
    assert out.shape == (B, Fout, H - kernel_size + 1, W - kernel_size + 1)
    # Tolerance reflects bf16 matmul operands + bf16 staging of the conv output
    # (statistics and normalization math stay f32); post-BN outputs are O(1).
    assert jnp.allclose(out, ref, atol=3e-2, rtol=3e-2), "mismatch vs reference"

    print("KERNEL_OK")
</pallas_src>

<mosaic_0001>
module attributes {stable_mosaic.version = 11 : i64} {
  func.func @matmul_stats_kernel(%arg0: i32, %arg1: i32, %arg2: memref<512x128xbf16, #tpu.memory_space<vmem>>, %arg3: memref<128x128xbf16, #tpu.memory_space<vmem>>, %arg4: memref<512x128xbf16, #tpu.memory_space<vmem>>, %arg5: memref<1x128xf32, #tpu.memory_space<vmem>>, %arg6: memref<1x128xf32, #tpu.memory_space<vmem>>) attributes {dimension_semantics = [#tpu.dimension_semantics<parallel>, #tpu.dimension_semantics<arbitrary>], iteration_bounds = array<i64: 1, 2>, scalar_prefetch = 0 : i64, scratch_operands = 0 : i64, tpu.core_type = #tpu.core_type<tc>, window_params = [{transform_indices = @transform_0, window_bounds = array<i64: 512, 128>}, {transform_indices = @transform_1, window_bounds = array<i64: 128, 128>}, {transform_indices = @transform_2, window_bounds = array<i64: 512, 128>}, {transform_indices = @transform_3, window_bounds = array<i64: 1, 128>}, {transform_indices = @transform_4, window_bounds = array<i64: 1, 128>}]} {
    %c0 = arith.constant 0 : index
    %c0_0 = arith.constant 0 : index
    %0 = vector.load %arg2[%c0, %c0_0] : memref<512x128xbf16, #tpu.memory_space<vmem>>, vector<512x128xbf16>
    %c0_1 = arith.constant 0 : index
    %c0_2 = arith.constant 0 : index
    %1 = vector.load %arg3[%c0_1, %c0_2] : memref<128x128xbf16, #tpu.memory_space<vmem>>, vector<128x128xbf16>
    %cst = arith.constant dense<0.000000e+00> : vector<512x128xf32>
    %2 = tpu.matmul %0, %1, %cst {dimension_numbers = #tpu.dot_dimension_numbers<[1], [0], [0], [1], [0, 0, 1, 1], [], []>} : vector<512x128xbf16>, vector<128x128xbf16>, vector<512x128xf32> -> vector<512x128xf32>
    %3 = arith.truncf %2 : vector<512x128xf32> to vector<512x128xbf16>
    %c0_3 = arith.constant 0 : index
    %c0_4 = arith.constant 0 : index
    %4 = vector.load %arg4[%c0_3, %c0_4] : memref<512x128xbf16, #tpu.memory_space<vmem>>, vector<512x128xbf16>
    tpu.vector_store %arg4[%c0_3, %c0_4], %3 {strides = array<i32>} : memref<512x128xbf16, #tpu.memory_space<vmem>>, vector<512x128xbf16>,
    %c0_i32 = arith.constant 0 : i32
    %5 = arith.cmpi eq, %arg1, %c0_i32 : i32
    %6 = arith.extui %5 : i1 to i32
    %c0_i32_5 = arith.constant 0 : i32
    %7 = arith.cmpi ne, %6, %c0_i32_5 : i32
    scf.if %7 {
      %cst_16 = arith.constant 0.000000e+00 : f32
      %19 = vector.broadcast %cst_16 : f32 to vector<1x128xf32>
      %c0_17 = arith.constant 0 : index
      %c0_18 = arith.constant 0 : index
      %20 = vector.load %arg5[%c0_17, %c0_18] : memref<1x128xf32, #tpu.memory_space<vmem>>, vector<1x128xf32>
      tpu.vector_store %arg5[%c0_17, %c0_18], %19 {strides = array<i32>} : memref<1x128xf32, #tpu.memory_space<vmem>>, vector<1x128xf32>,
      %cst_19 = arith.constant 0.000000e+00 : f32
      %21 = vector.broadcast %cst_19 : f32 to vector<1x128xf32>
      %c0_20 = arith.constant 0 : index
      %c0_21 = arith.constant 0 : index
      %22 = vector.load %arg6[%c0_20, %c0_21] : memref<1x128xf32, #tpu.memory_space<vmem>>, vector<1x128xf32>
      tpu.vector_store %arg6[%c0_20, %c0_21], %21 {strides = array<i32>} : memref<1x128xf32, #tpu.memory_space<vmem>>, vector<1x128xf32>,
    } else {
    }
    %c0_6 = arith.constant 0 : index
    %c0_7 = arith.constant 0 : index
    %8 = vector.load %arg5[%c0_6, %c0_7] : memref<1x128xf32, #tpu.memory_space<vmem>>, vector<1x128xf32>
    %cst_8 = arith.constant dense<0.000000e+00> : vector<128xf32>
    %9 = vector.multi_reduction <add>, %2, %cst_8 [0] : vector<512x128xf32> to vector<128xf32>
    %10 = vector.shape_cast %9 : vector<128xf32> to vector<1x128xf32>
    %11 = arith.addf %8, %10 : vector<1x128xf32>
    %c0_9 = arith.constant 0 : index
    %c0_10 = arith.constant 0 : index
    %12 = vector.load %arg5[%c0_9, %c0_10] : memref<1x128xf32, #tpu.memory_space<vmem>>, vector<1x128xf32>
    tpu.vector_store %arg5[%c0_9, %c0_10], %11 {strides = array<i32>} : memref<1x128xf32, #tpu.memory_space<vmem>>, vector<1x128xf32>,
    %c0_11 = arith.constant 0 : index
    %c0_12 = arith.constant 0 : index
    %13 = vector.load %arg6[%c0_11, %c0_12] : memref<1x128xf32, #tpu.memory_space<vmem>>, vector<1x128xf32>
    %14 = arith.mulf %2, %2 : vector<512x128xf32>
    %cst_13 = arith.constant dense<0.000000e+00> : vector<128xf32>
    %15 = vector.multi_reduction <add>, %14, %cst_13 [0] : vector<512x128xf32> to vector<128xf32>
    %16 = vector.shape_cast %15 : vector<128xf32> to vector<1x128xf32>
    %17 = arith.addf %13, %16 : vector<1x128xf32>
    %c0_14 = arith.constant 0 : index
    %c0_15 = arith.constant 0 : index
    %18 = vector.load %arg6[%c0_14, %c0_15] : memref<1x128xf32, #tpu.memory_space<vmem>>, vector<1x128xf32>
    tpu.vector_store %arg6[%c0_14, %c0_15], %17 {strides = array<i32>} : memref<1x128xf32, #tpu.memory_space<vmem>>, vector<1x128xf32>,
    return
  }
  func.func @transform_0(%arg0: i32, %arg1: i32) -> (i32, i32) {
    %c0_i32 = arith.constant 0 : i32
    %c0_i32_0 = arith.constant 0 : i32
    return %arg1, %c0_i32 : i32, i32
  }
  func.func @transform_1(%arg0: i32, %arg1: i32) -> (i32, i32) {
    %c0_i32 = arith.constant 0 : i32
    %c0_i32_0 = arith.constant 0 : i32
    return %c0_i32, %arg0 : i32, i32
  }
  func.func @transform_2(%arg0: i32, %arg1: i32) -> (i32, i32) {
    %c0_i32 = arith.constant 0 : i32
    return %arg1, %arg0 : i32, i32
  }
  func.func @transform_3(%arg0: i32, %arg1: i32) -> (i32, i32) {
    %c0_i32 = arith.constant 0 : i32
    %c0_i32_0 = arith.constant 0 : i32
    return %c0_i32, %arg0 : i32, i32
  }
  func.func @transform_4(%arg0: i32, %arg1: i32) -> (i32, i32) {
    %c0_i32 = arith.constant 0 : i32
    %c0_i32_0 = arith.constant 0 : i32
    return %c0_i32, %arg0 : i32, i32
  }
}

</mosaic_0001>

<llo_original>
// kernel: tpu_custom_call.1
$region0: #{tpu_custom_call.1}
  #allocation0 [shape = 'u32[]', space=smem, size = 0x4, offset = 0x4, fixed_abs, tag = 'smem constant byte address 0x4 - core index']
  #allocation1 [shape = 'u32[144,128]{1,0:T(1,128)}', space=vmem, size = 0x12000, scoped, tag = 'internal scratch']
  %s0 = inlined_call_operand.hbm [shape: bf16[1024,128], index: 0, kind: input, shape index: {}]
  %s1 = inlined_call_operand.hbm [shape: bf16[128,128], index: 1, kind: input, shape index: {}]
  %s2 = inlined_call_operand.hbm [shape: bf16[1024,128], index: 2, kind: output, shape index: {0}]
  %s3 = inlined_call_operand.hbm [shape: f32[1,128], index: 3, kind: output, shape index: {1}]
  %s4 = inlined_call_operand.hbm [shape: f32[1,128], index: 4, kind: output, shape index: {2}]
  %5 = xla_tuple %s2, %s3, %s4
  %s6 = sld [smem:[#allocation0]]
  $region69: #{tpu_custom_call.1} parent=0
    _
  %s8 = ssub.s32 1, %s6
  %s9 = scalar_select 0, %s8, %s6
  $region1: #{tpu_custom_call.1} parent=0
    #allocation2 [shape = 'u8[262144]{0}', space=vmem, size = 0x40000, scoped, tag = 'input window, operand 0']
    #allocation3 [shape = 's32[2]{0}', space=sflag, size = 0x8, scoped, tag = 'scoped memory for tpu_custom_call.1']
    #allocation4 [shape = 's32[2]{0}', space=sflag, size = 0x8, scoped, tag = 'scoped memory for tpu_custom_call.1']
    #allocation5 [shape = 'u8[32768]{0}', space=vmem, size = 0x8000, scoped, tag = 'input window, operand 1, single buffered']
    #allocation6 [shape = 's32[1]{0}', space=sflag, size = 0x4, scoped, tag = 'scoped memory for tpu_custom_call.1']
    #allocation7 [shape = 'u8[262144]{0}', space=vmem, size = 0x40000, scoped, tag = 'output window, operand 0']
    #allocation8 [shape = 'u8[512]{0}', space=vmem, size = 0x400, scoped, tag = 'output window, operand 1, single buffered']
    #allocation9 [shape = 's32[1]{0}', space=sflag, size = 0x4, scoped, tag = 'scoped memory for tpu_custom_call.1']
    #allocation10 [shape = 'u8[512]{0}', space=vmem, size = 0x400, scoped, tag = 'output window, operand 2, single buffered']
    %10 = vsyncpa [#allocation3], 0
    %s11 = scalar_lea.sflag [#allocation3], 1
    %12 = vsyncpa %s11, 0
    %13 = vsyncpa [#allocation6], 0
    %14 = vsyncpa [#allocation4], 0
    %s15 = scalar_lea.sflag [#allocation4], 1
    %16 = vsyncpa %s15, 0
    %17 = vsyncpa [#allocation9], 0
    loop: start=0, step=1, limit=4
    $region2: #{tpu_custom_call.1} parent=1 // loop_pre_header
      _
    $region3: #{tpu_custom_call.1} parent=1 // loop_header
      %s19 = sphi 0, %s23
      %p20 = scmp.ge.s32.totalorder %s19, 4
      %s26 = sphi 0, %s38
      %s27 = sphi 0, %s34
      %s28 = sphi 0, %s26
      %s29 = sphi 0, %s27
      %s30 = sphi 0, %s28
      %s31 = sphi 0, %s29
      %s41 = sphi 0, %s43
      %s44 = sphi 0, %s41
      %s45 = sphi 0, %s44
      %s61 = sphi 0, %s45
      %s67 = sphi 0, %s69
      %s70 = sphi 0, %s67
      %s71 = sphi 0, %s70
      %s87 = sphi 0, %s71
      %s95 = sphi 0, %s97
      %s98 = sphi 0, %s95
      %s99 = sphi 0, %s98
      %s115 = sphi 0, %s99
      %s121 = sphi 0, %s123
      %s124 = sphi 0, %s121
      %s125 = sphi 0, %s124
      %s141 = sphi 0, %s125
      %s147 = sphi 0, %s149
      %s150 = sphi 0, %s147
      %s151 = sphi 0, %s150
      %s167 = sphi 0, %s151
    $region4: #{tpu_custom_call.1} parent=1 // loop_header_branch
      %22 = sbr.rel (%p20) target = $region8
    $region5: #{tpu_custom_call.1} parent=1 // loop_body
      %s24 = ssub.s32 %s19, 1
      %s25 = ssub.s32 %s19, 2
      %s32 = sadd.s32 1, %s27
      %p33 = scmp.ge.s32.totalorder %s32, 2
      %s34 = scalar_select %p33, 0, %s32
      %s35 = sadd.s32 1, %s26
      %s36 = scalar_select %p33, %s35, %s26
      %p37 = scmp.ge.s32.totalorder %s36, 1
      %s38 = scalar_select %p37, 0, %s36
      %s39 = ssub.s32 %s27, %s34
      %p40 = scmp.eq.s32.totalorder %s39, 0
      %s42 = sadd.s32 %s41, 1
      %s43 = scalar_select %p40, %s41, %s42
      %p46 = pneg %p40
      %p47 = scmp.eq.s32.totalorder %s19, 1
      %p48 = por %p46, %p47
      %p49 = scmp.ne.s32.totalorder %s41, %s44
      %p50 = scmp.eq.s32.totalorder %s19, 0
      %p51 = por %p49, %p50
      %p52 = scmp.ne.s32.totalorder %s41, %s44
      %p53 = scmp.eq.s32.totalorder %s24, 1
      %p54 = por %p52, %p53
      %p55 = scmp.ne.s32.totalorder %s44, %s45
      %p56 = scmp.eq.s32.totalorder %s24, 0
      %p57 = por %p55, %p56
      %p58 = scmp.ne.s32.totalorder %s44, %s45
      %p59 = scmp.eq.s32.totalorder %s25, 1
      %p60 = por %p58, %p59
      %p62 = scmp.ne.s32.totalorder %s45, %s61
      %p63 = scmp.eq.s32.totalorder %s25, 0
      %p64 = por %p62, %p63
      %s65 = ssub.s32 %s26, %s38
      %p66 = scmp.eq.s32.totalorder %s65, 0
      %s68 = sadd.s32 %s67, 1
      %s69 = scalar_select %p66, %s67, %s68
      %p72 = pneg %p66
      %p73 = scmp.eq.s32.totalorder %s19, 1
      %p74 = por %p72, %p73
      %p75 = scmp.ne.s32.totalorder %s67, %s70
      %p76 = scmp.eq.s32.totalorder %s19, 0
      %p77 = por %p75, %p76
      %p78 = scmp.ne.s32.totalorder %s67, %s70
      %p79 = scmp.eq.s32.totalorder %s24, 1
      %p80 = por %p78, %p79
      %p81 = scmp.ne.s32.totalorder %s70, %s71
      %p82 = scmp.eq.s32.totalorder %s24, 0
      %p83 = por %p81, %p82
      %p84 = scmp.ne.s32.totalorder %s70, %s71
      %p85 = scmp.eq.s32.totalorder %s25, 1
      %p86 = por %p84, %p85
      %p88 = scmp.ne.s32.totalorder %s71, %s87
      %p89 = scmp.eq.s32.totalorder %s25, 0
      %p90 = por %p88, %p89
      %s91 = ssub.s32 %s27, %s34
      %s92 = ssub.s32 %s26, %s38
      %s93 = sor.u32 %s91, %s92
      %p94 = scmp.eq.s32.totalorder %s93, 0
      %s96 = sadd.s32 %s95, 1
      %s97 = scalar_select %p94, %s95, %s96
      %p100 = pneg %p94
      %p101 = scmp.eq.s32.totalorder %s19, 1
      %p102 = por %p100, %p101
      %p103 = scmp.ne.s32.totalorder %s95, %s98
      %p104 = scmp.eq.s32.totalorder %s19, 0
      %p105 = por %p103, %p104
      %p106 = scmp.ne.s32.totalorder %s95, %s98
      %p107 = scmp.eq.s32.totalorder %s24, 1
      %p108 = por %p106, %p107
      %p109 = scmp.ne.s32.totalorder %s98, %s99
      %p110 = scmp.eq.s32.totalorder %s24, 0
      %p111 = por %p109, %p110
      %p112 = scmp.ne.s32.totalorder %s98, %s99
      %p113 = scmp.eq.s32.totalorder %s25, 1
      %p114 = por %p112, %p113
      %p116 = scmp.ne.s32.totalorder %s99, %s115
      %p117 = scmp.eq.s32.totalorder %s25, 0
      %p118 = por %p116, %p117
      %s119 = ssub.s32 %s26, %s38
      %p120 = scmp.eq.s32.totalorder %s119, 0
      %s122 = sadd.s32 %s121, 1
      %s123 = scalar_select %p120, %s121, %s122
      %p126 = pneg %p120
      %p127 = scmp.eq.s32.totalorder %s19, 1
      %p128 = por %p126, %p127
      %p129 = scmp.ne.s32.totalorder %s121, %s124
      %p130 = scmp.eq.s32.totalorder %s19, 0
      %p131 = por %p129, %p130
      %p132 = scmp.ne.s32.totalorder %s121, %s124
      %p133 = scmp.eq.s32.totalorder %s24, 1
      %p134 = por %p132, %p133
      %p135 = scmp.ne.s32.totalorder %s124, %s125
      %p136 = scmp.eq.s32.totalorder %s24, 0
      %p137 = por %p135, %p136
      %p138 = scmp.ne.s32.totalorder %s124, %s125
      %p139 = scmp.eq.s32.totalorder %s25, 1
      %p140 = por %p138, %p139
      %p142 = scmp.ne.s32.totalorder %s125, %s141
      %p143 = scmp.eq.s32.totalorder %s25, 0
      %p144 = por %p142, %p143
      %s145 = ssub.s32 %s26, %s38
      %p146 = scmp.eq.s32.totalorder %s145, 0
      %s148 = sadd.s32 %s147, 1
      %s149 = scalar_select %p146, %s147, %s148
      %p152 = pneg %p146
      %p153 = scmp.eq.s32.totalorder %s19, 1
      %p154 = por %p152, %p153
      %p155 = scmp.ne.s32.totalorder %s147, %s150
      %p156 = scmp.eq.s32.totalorder %s19, 0
      %p157 = por %p155, %p156
      %p158 = scmp.ne.s32.totalorder %s147, %s150
      %p159 = scmp.eq.s32.totalorder %s24, 1
      %p160 = por %p158, %p159
      %p161 = scmp.ne.s32.totalorder %s150, %s151
      %p162 = scmp.eq.s32.totalorder %s24, 0
      %p163 = por %p161, %p162
      %p164 = scmp.ne.s32.totalorder %s150, %s151
      %p165 = scmp.eq.s32.totalorder %s25, 1
      %p166 = por %p164, %p165
      %p168 = scmp.ne.s32.totalorder %s151, %s167
      %p169 = scmp.eq.s32.totalorder %s25, 0
      %p170 = por %p168, %p169
      %p171 = scmp.le.s32.totalorder 1, %s19
      %p172 = scmp.lt.s32.totalorder %s19, 3
      %p173 = pnand %p171, %p172
      %p174 = pneg %p173
      // Predicated region
      $region9: #{tpu_custom_call.1} parent=5 // pred_check
        _
      $region10: #{tpu_custom_call.1} parent=5 // pred_check_branch
        %176 = sbr.rel (%p173) target = $region12
      $region11: #{tpu_custom_call.1} parent=5 // pred_region
        %s177 = ssub.s32 %s19, 1
        // Predicated region
        $region13: #{tpu_custom_call.1} parent=11 // pred_check
          %p178 = pneg %p83
        $region14: #{tpu_custom_call.1} parent=11 // pred_check_branch
          %180 = sbr.rel (%p178) target = $region16
        $region15: #{tpu_custom_call.1} parent=11 // pred_region
          %s182 = ssub.s32 1024, 1024
          %183 = vsyncadd [#allocation6], %s182
          %s184 = smul.addr %s28, 64
          %s185 = scalar_lea.hbm %s1, %s184
          %s186 = sshll.u32 [#allocation5], 4
          %s187 = int_to_ptr.vmem [resolvable:$true] %s186
          %192 = dma.hbm_to_vmem [thread:$0]  %s185, 1024, %s187, [#allocation6], 64, 64, 4
        $region16: #{tpu_custom_call.1} parent=11 // pred_fallthru
          _
      $region12: #{tpu_custom_call.1} parent=5 // pred_fallthru
        _
      %p193 = scmp.lt.s32.totalorder %s19, 2
      // Predicated region
      $region17: #{tpu_custom_call.1} parent=5 // pred_check
        %p194 = pneg %p193
      $region18: #{tpu_custom_call.1} parent=5 // pred_check_branch
        %196 = sbr.rel (%p194) target = $region20
      $region19: #{tpu_custom_call.1} parent=5 // pred_region
        // Predicated region
        $region21: #{tpu_custom_call.1} parent=19 // pred_check
          %p197 = pneg %p51
        $region22: #{tpu_custom_call.1} parent=19 // pred_check_branch
          %199 = sbr.rel (%p197) target = $region24
        $region23: #{tpu_custom_call.1} parent=19 // pred_region
          %s200 = sand.u32 %s41, 1
          %s201 = scalar_lea.sflag [#allocation3], %s200
          %s202 = sand.u32 %s41, 1
          %s203 = smul.addr %s202, 256
          %s204 = scalar_lea.vmem [#allocation2], %s203
          %s205 = smul.u32 64, %s27
          %s207 = ssub.s32 4096, 4096
          %208 = vsyncadd %s201, %s207
          %s209 = smul.addr %s205, 64
          %s210 = scalar_lea.hbm %s0, %s209
          %s211 = sshll.u32 %s204, 4
          %s212 = int_to_ptr.vmem [resolvable:$true] %s211
          %217 = dma.hbm_to_vmem [thread:$0]  %s210, 4096, %s212, %s201, 64, 64, 4
        $region24: #{tpu_custom_call.1} parent=19 // pred_fallthru
          _
      $region20: #{tpu_custom_call.1} parent=5 // pred_fallthru
        _
      %p218 = scmp.le.s32.totalorder 1, %s19
      %p219 = scmp.lt.s32.totalorder %s19, 3
      %p220 = pnand %p218, %p219
      %p221 = pneg %p220
      // Predicated region
      $region25: #{tpu_custom_call.1} parent=5 // pred_check
        _
      $region26: #{tpu_custom_call.1} parent=5 // pred_check_branch
        %223 = sbr.rel (%p220) target = $region28
      $region27: #{tpu_custom_call.1} parent=5 // pred_region
        %s224 = ssub.s32 %s19, 1
        %s225 = sand.u32 %s44, 1
        %s226 = scalar_lea.sflag [#allocation3], %s225
        %s227 = sand.u32 %s44, 1
        %s228 = smul.addr %s227, 256
        %s229 = scalar_lea.vmem [#allocation2], %s228
        // Predicated region
        $region29: #{tpu_custom_call.1} parent=27 // pred_check
          %p230 = pneg %p57
        $region30: #{tpu_custom_call.1} parent=27 // pred_check_branch
          %232 = sbr.rel (%p230) target = $region32
        $region31: #{tpu_custom_call.1} parent=27 // pred_region
          %233 = dma.done %s226, 4096
        $region32: #{tpu_custom_call.1} parent=27 // pred_fallthru
          _
        // Predicated region
        $region33: #{tpu_custom_call.1} parent=27 // pred_check
          %p234 = pneg %p83
        $region34: #{tpu_custom_call.1} parent=27 // pred_check_branch
          %236 = sbr.rel (%p234) target = $region36
        $region35: #{tpu_custom_call.1} parent=27 // pred_region
          %237 = dma.done [#allocation6], 1024
        $region36: #{tpu_custom_call.1} parent=27 // pred_fallthru
          _
        %s238 = sand.u32 %s44, 1
        %s239 = scalar_lea.sflag [#allocation3], %s238
        %s240 = sand.u32 %s44, 1
        %s241 = smul.addr %s240, 256
        %s242 = scalar_lea.vmem [#allocation2], %s241
        %p243 = pneg %p57
        %p244 = pneg %p54
        %p245 = pneg %p83
        %p246 = pneg %p80
        %p247 = pneg %p111
        %p248 = pneg %p108
        %s249 = sand.u32 %s98, 1
        %s250 = scalar_lea.sflag [#allocation4], %s249
        %s251 = sand.u32 %s98, 1
        %s252 = smul.addr %s251, 256
        %s253 = scalar_lea.vmem [#allocation7], %s252
        %p254 = pneg %p137
        %p255 = pneg %p134
        %p256 = pneg %p163
        %p257 = pneg %p160
        %s258 = smul.u32 64, %s29
        %s259 = smul.u32 64, %s29
        %v261 = vld [vmem:[%s229] sm:$0xf]
        %v262 = vld [vmem:[%s229 + $0x4] sm:$0xf]
        %v263 = vld [vmem:[%s229 + $0x8] sm:$0xf]
        %v264 = vld [vmem:[%s229 + $0xc] sm:$0xf]
        %v265 = vld [vmem:[%s229 + $0x10] sm:$0xf]
        %v266 = vld [vmem:[%s229 + $0x14] sm:$0xf]
        %v267 = vld [vmem:[%s229 + $0x18] sm:$0xf]
        %v268 = vld [vmem:[%s229 + $0x1c] sm:$0xf]
        %v269 = vld [vmem:[%s229 + $0x20] sm:$0xf]
        %v270 = vld [vmem:[%s229 + $0x24] sm:$0xf]
        %v271 = vld [vmem:[%s229 + $0x28] sm:$0xf]
        %v272 = vld [vmem:[%s229 + $0x2c] sm:$0xf]
        %v273 = vld [vmem:[%s229 + $0x30] sm:$0xf]
        %v274 = vld [vmem:[%s229 + $0x34] sm:$0xf]
        %v275 = vld [vmem:[%s229 + $0x38] sm:$0xf]
        %v276 = vld [vmem:[%s229 + $0x3c] sm:$0xf]
        %v277 = vld [vmem:[%s229 + $0x40] sm:$0xf]
        %v278 = vld [vmem:[%s229 + $0x44] sm:$0xf]
        %v279 = vld [vmem:[%s229 + $0x48] sm:$0xf]
        %v280 = vld [vmem:[%s229 + $0x4c] sm:$0xf]
        %v281 = vld [vmem:[%s229 + $0x50] sm:$0xf]
        %v282 = vld [vmem:[%s229 + $0x54] sm:$0xf]
        %v283 = vld [vmem:[%s229 + $0x58] sm:$0xf]
        %v284 = vld [vmem:[%s229 + $0x5c] sm:$0xf]
        %v285 = vld [vmem:[%s229 + $0x60] sm:$0xf]
        %v286 = vld [vmem:[%s229 + $0x64] sm:$0xf]
        %v287 = vld [vmem:[%s229 + $0x68] sm:$0xf]
        %v288 = vld [vmem:[%s229 + $0x6c] sm:$0xf]
        %v289 = vld [vmem:[%s229 + $0x70] sm:$0xf]
        %v290 = vld [vmem:[%s229 + $0x74] sm:$0xf]
        %v291 = vld [vmem:[%s229 + $0x78] sm:$0xf]
        %v292 = vld [vmem:[%s229 + $0x7c] sm:$0xf]
        %v293 = vld [vmem:[%s229 + $0x80] sm:$0xf]
        %v294 = vld [vmem:[%s229 + $0x84] sm:$0xf]
        %v295 = vld [vmem:[%s229 + $0x88] sm:$0xf]
        %v296 = vld [vmem:[%s229 + $0x8c] sm:$0xf]
        %v297 = vld [vmem:[%s229 + $0x90] sm:$0xf]
        %v298 = vld [vmem:[%s229 + $0x94] sm:$0xf]
        %v299 = vld [vmem:[%s229 + $0x98] sm:$0xf]
        %v300 = vld [vmem:[%s229 + $0x9c] sm:$0xf]
        %v301 = vld [vmem:[%s229 + $0xa0] sm:$0xf]
        %v302 = vld [vmem:[%s229 + $0xa4] sm:$0xf]
        %v303 = vld [vmem:[%s229 + $0xa8] sm:$0xf]
        %v304 = vld [vmem:[%s229 + $0xac] sm:$0xf]
        %v305 = vld [vmem:[%s229 + $0xb0] sm:$0xf]
        %v306 = vld [vmem:[%s229 + $0xb4] sm:$0xf]
        %v307 = vld [vmem:[%s229 + $0xb8] sm:$0xf]
        %v308 = vld [vmem:[%s229 + $0xbc] sm:$0xf]
        %v309 = vld [vmem:[%s229 + $0xc0] sm:$0xf]
        %v310 = vld [vmem:[%s229 + $0xc4] sm:$0xf]
        %v311 = vld [vmem:[%s229 + $0xc8] sm:$0xf]
        %v312 = vld [vmem:[%s229 + $0xcc] sm:$0xf]
        %v313 = vld [vmem:[%s229 + $0xd0] sm:$0xf]
        %v314 = vld [vmem:[%s229 + $0xd4] sm:$0xf]
        %v315 = vld [vmem:[%s229 + $0xd8] sm:$0xf]
        %v316 = vld [vmem:[%s229 + $0xdc] sm:$0xf]
        %v317 = vld [vmem:[%s229 + $0xe0] sm:$0xf]
        %v318 = vld [vmem:[%s229 + $0xe4] sm:$0xf]
        %v319 = vld [vmem:[%s229 + $0xe8] sm:$0xf]
        %v320 = vld [vmem:[%s229 + $0xec] sm:$0xf]
        %v321 = vld [vmem:[%s229 + $0xf0] sm:$0xf]
        %v322 = vld [vmem:[%s229 + $0xf4] sm:$0xf]
        %v323 = vld [vmem:[%s229 + $0xf8] sm:$0xf]
        %v324 = vld [vmem:[%s229 + $0xfc] sm:$0xf]
        %v325 = vld [vmem:[#allocation5] sm:$0xf]
        %v326 = vld [vmem:[#allocation5 + $0x4] sm:$0xf]
        %v327 = vld [vmem:[#allocation5 + $0x8] sm:$0xf]
        %v328 = vld [vmem:[#allocation5 + $0xc] sm:$0xf]
        %v329 = vld [vmem:[#allocation5 + $0x10] sm:$0xf]
        %v330 = vld [vmem:[#allocation5 + $0x14] sm:$0xf]
        %v331 = vld [vmem:[#allocation5 + $0x18] sm:$0xf]
        %v332 = vld [vmem:[#allocation5 + $0x1c] sm:$0xf]
        %v333 = vld [vmem:[#allocation5 + $0x20] sm:$0xf]
        %v334 = vld [vmem:[#allocation5 + $0x24] sm:$0xf]
        %v335 = vld [vmem:[#allocation5 + $0x28] sm:$0xf]
        %v336 = vld [vmem:[#allocation5 + $0x2c] sm:$0xf]
        %v337 = vld [vmem:[#allocation5 + $0x30] sm:$0xf]
        %v338 = vld [vmem:[#allocation5 + $0x34] sm:$0xf]
        %v339 = vld [vmem:[#allocation5 + $0x38] sm:$0xf]
        %v340 = vld [vmem:[#allocation5 + $0x3c] sm:$0xf]
        %v405 = vunpack.c.l.b16 %v261
        %v406 = vunpack.c.l.b16 %v262
        %v407 = vunpack.c.l.b16 %v263
        %v408 = vunpack.c.l.b16 %v264
        %v409 = vunpack.c.l.b16 %v265
        %v410 = vunpack.c.l.b16 %v266
        %v411 = vunpack.c.l.b16 %v267
        %v412 = vunpack.c.l.b16 %v268
        %v413 = vunpack.c.l.b16 %v269
        %v414 = vunpack.c.l.b16 %v270
        %v415 = vunpack.c.l.b16 %v271
        %v416 = vunpack.c.l.b16 %v272
        %v417 = vunpack.c.l.b16 %v273
        %v418 = vunpack.c.l.b16 %v274
        %v419 = vunpack.c.l.b16 %v275
        %v420 = vunpack.c.l.b16 %v276
        %v421 = vunpack.c.l.b16 %v277
        %v422 = vunpack.c.l.b16 %v278
        %v423 = vunpack.c.l.b16 %v279
        %v424 = vunpack.c.l.b16 %v280
        %v425 = vunpack.c.l.b16 %v281
        %v426 = vunpack.c.l.b16 %v282
        %v427 = vunpack.c.l.b16 %v283
        %v428 = vunpack.c.l.b16 %v284
        %v429 = vunpack.c.l.b16 %v285
        %v430 = vunpack.c.l.b16 %v286
        %v431 = vunpack.c.l.b16 %v287
        %v432 = vunpack.c.l.b16 %v288
        %v433 = vunpack.c.l.b16 %v289
        %v434 = vunpack.c.l.b16 %v290
        %v435 = vunpack.c.l.b16 %v291
        %v436 = vunpack.c.l.b16 %v292
        %v437 = vunpack.c.l.b16 %v293
        %v438 = vunpack.c.l.b16 %v294
        %v439 = vunpack.c.l.b16 %v295
        %v440 = vunpack.c.l.b16 %v296
        %v441 = vunpack.c.l.b16 %v297
        %v442 = vunpack.c.l.b16 %v298
        %v443 = vunpack.c.l.b16 %v299
        %v444 = vunpack.c.l.b16 %v300
        %v445 = vunpack.c.l.b16 %v301
        %v446 = vunpack.c.l.b16 %v302
        %v447 = vunpack.c.l.b16 %v303
        %v448 = vunpack.c.l.b16 %v304
        %v449 = vunpack.c.l.b16 %v305
        %v450 = vunpack.c.l.b16 %v306
        %v451 = vunpack.c.l.b16 %v307
        %v452 = vunpack.c.l.b16 %v308
        %v453 = vunpack.c.l.b16 %v309
        %v454 = vunpack.c.l.b16 %v310
        %v455 = vunpack.c.l.b16 %v311
        %v456 = vunpack.c.l.b16 %v312
        %v457 = vunpack.c.l.b16 %v313
        %v458 = vunpack.c.l.b16 %v314
        %v459 = vunpack.c.l.b16 %v315
        %v460 = vunpack.c.l.b16 %v316
        %v461 = vunpack.c.l.b16 %v317
        %v462 = vunpack.c.l.b16 %v318
        %v463 = vunpack.c.l.b16 %v319
        %v464 = vunpack.c.l.b16 %v320
        %v465 = vunpack.c.l.b16 %v321
        %v466 = vunpack.c.l.b16 %v322
        %v467 = vunpack.c.l.b16 %v323
        %v468 = vunpack.c.l.b16 %v324
        %v469 = vpack.c.b16 %v406, %v405
        %v470 = vpack.c.b16 %v408, %v407
        %v471 = vpack.c.b16 %v410, %v409
        %v472 = vpack.c.b16 %v412, %v411
        %v473 = vpack.c.b16 %v414, %v413
        %v474 = vpack.c.b16 %v416, %v415
        %v475 = vpack.c.b16 %v418, %v417
        %v476 = vpack.c.b16 %v420, %v419
        %v477 = vpack.c.b16 %v422, %v421
        %v478 = vpack.c.b16 %v424, %v423
        %v479 = vpack.c.b16 %v426, %v425
        %v480 = vpack.c.b16 %v428, %v427
        %v481 = vpack.c.b16 %v430, %v429
        %v482 = vpack.c.b16 %v432, %v431
        %v483 = vpack.c.b16 %v434, %v433
        %v484 = vpack.c.b16 %v436, %v435
        %v485 = vpack.c.b16 %v438, %v437
        %v486 = vpack.c.b16 %v440, %v439
        %v487 = vpack.c.b16 %v442, %v441
        %v488 = vpack.c.b16 %v444, %v443
        %v489 = vpack.c.b16 %v446, %v445
        %v490 = vpack.c.b16 %v448, %v447
        %v491 = vpack.c.b16 %v450, %v449
        %v492 = vpack.c.b16 %v452, %v451
        %v493 = vpack.c.b16 %v454, %v453
        %v494 = vpack.c.b16 %v456, %v455
        %v495 = vpack.c.b16 %v458, %v457
        %v496 = vpack.c.b16 %v460, %v459
        %v497 = vpack.c.b16 %v462, %v461
        %v498 = vpack.c.b16 %v464, %v463
        %v499 = vpack.c.b16 %v466, %v465
        %v500 = vpack.c.b16 %v468, %v467
        %v549 = vunpack.c.l.b16 %v325
        %v550 = vunpack.c.l.b16 %v326
        %v551 = vunpack.c.l.b16 %v327
        %v552 = vunpack.c.l.b16 %v328
        %v553 = vunpack.c.l.b16 %v329
        %v554 = vunpack.c.l.b16 %v330
        %v555 = vunpack.c.l.b16 %v331
        %v556 = vunpack.c.l.b16 %v332
        %v557 = vunpack.c.l.b16 %v333
        %v558 = vunpack.c.l.b16 %v334
        %v559 = vunpack.c.l.b16 %v335
        %v560 = vunpack.c.l.b16 %v336
        %v561 = vunpack.c.l.b16 %v337
        %v562 = vunpack.c.l.b16 %v338
        %v563 = vunpack.c.l.b16 %v339
        %v564 = vunpack.c.l.b16 %v340
        %v565 = vpack.c.b16 %v550, %v549
        %v566 = vpack.c.b16 %v552, %v551
        %v567 = vpack.c.b16 %v554, %v553
        %v568 = vpack.c.b16 %v556, %v555
        %v569 = vpack.c.b16 %v558, %v557
        %v570 = vpack.c.b16 %v560, %v559
        %v571 = vpack.c.b16 %v562, %v561
        %v572 = vpack.c.b16 %v564, %v563
        %581 = vmatprep.subr.bf16.mxu0 0
        %582 = vmatpush1.bf16.msra.mxu0 %v572
        %583 = vmatprep.subr.bf16.mxu0 0
        %584 = vmatpush1.bf16.msra.mxu0 %v571
        %585 = vmatprep.subr.bf16.mxu0 0
        %586 = vmatpush1.bf16.msra.mxu0 %v570
        %587 = vmatprep.subr.bf16.mxu0 0
        %588 = vmatpush1.bf16.msra.mxu0 %v569
        %589 = vmatprep.subr.bf16.mxu0 0
        %590 = vmatpush1.bf16.msra.mxu0 %v568
        %591 = vmatprep.subr.bf16.mxu0 0
        %592 = vmatpush1.bf16.msra.mxu0 %v567
        %593 = vmatprep.subr.bf16.mxu0 0
        %594 = vmatpush1.bf16.msra.mxu0 %v566
        %595 = vmatprep.subr.bf16.mxu0 0
        %596 = vmatpush1.bf16.msra.mxu0 %v565
        %597 = vmatprep.subr.bf16.mxu0 0
        %598 = vmatpush2.bf16.msra.mxu0 0
        %599 = vmatprep.subr.bf16.mxu0 0
        %600 = vmatpush2.bf16.msra.mxu0 0
        %601 = vmatprep.subr.bf16.mxu0 0
        %602 = vmatpush2.bf16.msra.mxu0 0
        %603 = vmatprep.subr.bf16.mxu0 0
        %604 = vmatpush2.bf16.msra.mxu0 0
        %605 = vmatprep.subr.bf16.mxu0 0
        %606 = vmatpush2.bf16.msra.mxu0 0
        %607 = vmatprep.subr.bf16.mxu0 0
        %608 = vmatpush2.bf16.msra.mxu0 0
        %609 = vmatprep.subr.bf16.mxu0 0
        %610 = vmatpush2.bf16.msra.mxu0 0
        %611 = vmatprep.subr.bf16.mxu0 0
        %612 = vmatpush2.bf16.msra.mxu0 0
        %613 = vmatprep.mubr.bf16.mxu0 0
        %614 = vmatmul.mubr.bf16.gmra.mxu0 %v469
        %v615 = vpop.f32.mrf.mxu0
        %v616 = vadd.f32 0.0, %v615
        %v617 = vpop.f32.mrf.mxu0
        %v618 = vpop.f32.mrf.mxu0
        %v619 = vadd.f32 0.0, %v618
        %v620 = vpop.f32.mrf.mxu0
        %621 = vmatprep.mubr.bf16.mxu0 0
        %622 = vmatmul.mubr.bf16.gmra.mxu0 %v470
        %v623 = vpop.f32.mrf.mxu0
        %v624 = vadd.f32 0.0, %v623
        %v625 = vpop.f32.mrf.mxu0
        %v626 = vpop.f32.mrf.mxu0
        %v627 = vadd.f32 0.0, %v626
        %v628 = vpop.f32.mrf.mxu0
        %629 = vmatprep.mubr.bf16.mxu0 0
        %630 = vmatmul.mubr.bf16.gmra.mxu0 %v471
        %v631 = vpop.f32.mrf.mxu0
        %v632 = vadd.f32 0.0, %v631
        %v633 = vpop.f32.mrf.mxu0
        %v634 = vpop.f32.mrf.mxu0
        %v635 = vadd.f32 0.0, %v634
        %v636 = vpop.f32.mrf.mxu0
        %637 = vmatprep.mubr.bf16.mxu0 0
        %638 = vmatmul.mubr.bf16.gmra.mxu0 %v472
        %v639 = vpop.f32.mrf.mxu0
        %v640 = vadd.f32 0.0, %v639
        %v641 = vpop.f32.mrf.mxu0
        %v642 = vpop.f32.mrf.mxu0
        %v643 = vadd.f32 0.0, %v642
        %v644 = vpop.f32.mrf.mxu0
        %645 = vmatprep.mubr.bf16.mxu0 0
        %646 = vmatmul.mubr.bf16.gmra.mxu0 %v473
        %v647 = vpop.f32.mrf.mxu0
        %v648 = vadd.f32 0.0, %v647
        %v649 = vpop.f32.mrf.mxu0
        %v650 = vpop.f32.mrf.mxu0
        %v651 = vadd.f32 0.0, %v650
        %v652 = vpop.f32.mrf.mxu0
        %653 = vmatprep.mubr.bf16.mxu0 0
        %654 = vmatmul.mubr.bf16.gmra.mxu0 %v474
        %v655 = vpop.f32.mrf.mxu0
        %v656 = vadd.f32 0.0, %v655
        %v657 = vpop.f32.mrf.mxu0
        %v658 = vpop.f32.mrf.mxu0
        %v659 = vadd.f32 0.0, %v658
        %v660 = vpop.f32.mrf.mxu0
        %661 = vmatprep.mubr.bf16.mxu0 0
        %662 = vmatmul.mubr.bf16.gmra.mxu0 %v475
        %v663 = vpop.f32.mrf.mxu0
        %v664 = vadd.f32 0.0, %v663
        %v665 = vpop.f32.mrf.mxu0
        %v666 = vpop.f32.mrf.mxu0
        %v667 = vadd.f32 0.0, %v666
        %v668 = vpop.f32.mrf.mxu0
        %669 = vmatprep.mubr.bf16.mxu0 0
        %670 = vmatmul.mubr.bf16.gmra.mxu0 %v476
        %v671 = vpop.f32.mrf.mxu0
        %v672 = vadd.f32 0.0, %v671
        %v673 = vpop.f32.mrf.mxu0
        %v674 = vpop.f32.mrf.mxu0
        %v675 = vadd.f32 0.0, %v674
        %v676 = vpop.f32.mrf.mxu0
        %677 = vmatprep.mubr.bf16.mxu0 0
        %678 = vmatmul.mubr.bf16.gmra.mxu0 %v477
        %v679 = vpop.f32.mrf.mxu0
        %v680 = vadd.f32 0.0, %v679
        %v681 = vpop.f32.mrf.mxu0
        %v682 = vpop.f32.mrf.mxu0
        %v683 = vadd.f32 0.0, %v682
        %v684 = vpop.f32.mrf.mxu0
        %685 = vmatprep.mubr.bf16.mxu0 0
        %686 = vmatmul.mubr.bf16.gmra.mxu0 %v478
        %v687 = vpop.f32.mrf.mxu0
        %v688 = vadd.f32 0.0, %v687
        %v689 = vpop.f32.mrf.mxu0
        %v690 = vpop.f32.mrf.mxu0
        %v691 = vadd.f32 0.0, %v690
        %v692 = vpop.f32.mrf.mxu0
        %693 = vmatprep.mubr.bf16.mxu0 0
        %694 = vmatmul.mubr.bf16.gmra.mxu0 %v479
        %v695 = vpop.f32.mrf.mxu0
        %v696 = vadd.f32 0.0, %v695
        %v697 = vpop.f32.mrf.mxu0
        %v698 = vpop.f32.mrf.mxu0
        %v699 = vadd.f32 0.0, %v698
        %v700 = vpop.f32.mrf.mxu0
        %701 = vmatprep.mubr.bf16.mxu0 0
        %702 = vmatmul.mubr.bf16.gmra.mxu0 %v480
        %v703 = vpop.f32.mrf.mxu0
        %v704 = vadd.f32 0.0, %v703
        %v705 = vpop.f32.mrf.mxu0
        %v706 = vpop.f32.mrf.mxu0
        %v707 = vadd.f32 0.0, %v706
        %v708 = vpop.f32.mrf.mxu0
        %709 = vmatprep.mubr.bf16.mxu0 0
        %710 = vmatmul.mubr.bf16.gmra.mxu0 %v481
        %v711 = vpop.f32.mrf.mxu0
        %v712 = vadd.f32 0.0, %v711
        %v713 = vpop.f32.mrf.mxu0
        %v714 = vpop.f32.mrf.mxu0
        %v715 = vadd.f32 0.0, %v714
        %v716 = vpop.f32.mrf.mxu0
        %717 = vmatprep.mubr.bf16.mxu0 0
        %718 = vmatmul.mubr.bf16.gmra.mxu0 %v482
        %v719 = vpop.f32.mrf.mxu0
        %v720 = vadd.f32 0.0, %v719
        %v721 = vpop.f32.mrf.mxu0
        %v722 = vpop.f32.mrf.mxu0
        %v723 = vadd.f32 0.0, %v722
        %v724 = vpop.f32.mrf.mxu0
        %725 = vmatprep.mubr.bf16.mxu0 0
        %726 = vmatmul.mubr.bf16.gmra.mxu0 %v483
        %v727 = vpop.f32.mrf.mxu0
        %v728 = vadd.f32 0.0, %v727
        %v729 = vpop.f32.mrf.mxu0
        %v730 = vpop.f32.mrf.mxu0
        %v731 = vadd.f32 0.0, %v730
        %v732 = vpop.f32.mrf.mxu0
        %733 = vmatprep.mubr.bf16.mxu0 0
        %734 = vmatmul.mubr.bf16.gmra.mxu0 %v484
        %v735 = vpop.f32.mrf.mxu0
        %v736 = vadd.f32 0.0, %v735
        %v737 = vpop.f32.mrf.mxu0
        %v738 = vpop.f32.mrf.mxu0
        %v739 = vadd.f32 0.0, %v738
        %v740 = vpop.f32.mrf.mxu0
        %741 = vmatprep.mubr.bf16.mxu0 0
        %742 = vmatmul.mubr.bf16.gmra.mxu0 %v485
        %v743 = vpop.f32.mrf.mxu0
        %v744 = vadd.f32 0.0, %v743
        %v745 = vpop.f32.mrf.mxu0
        %v746 = vpop.f32.mrf.mxu0
        %v747 = vadd.f32 0.0, %v746
        %v748 = vpop.f32.mrf.mxu0
        %749 = vmatprep.mubr.bf16.mxu0 0
        %750 = vmatmul.mubr.bf16.gmra.mxu0 %v486
        %v751 = vpop.f32.mrf.mxu0
        %v752 = vadd.f32 0.0, %v751
        %v753 = vpop.f32.mrf.mxu0
        %v754 = vpop.f32.mrf.mxu0
        %v755 = vadd.f32 0.0, %v754
        %v756 = vpop.f32.mrf.mxu0
        %757 = vmatprep.mubr.bf16.mxu0 0
        %758 = vmatmul.mubr.bf16.gmra.mxu0 %v487
        %v759 = vpop.f32.mrf.mxu0
        %v760 = vadd.f32 0.0, %v759
        %v761 = vpop.f32.mrf.mxu0
        %v762 = vpop.f32.mrf.mxu0
        %v763 = vadd.f32 0.0, %v762
        %v764 = vpop.f32.mrf.mxu0
        %765 = vmatprep.mubr.bf16.mxu0 0
        %766 = vmatmul.mubr.bf16.gmra.mxu0 %v488
        %v767 = vpop.f32.mrf.mxu0
        %v768 = vadd.f32 0.0, %v767
        %v769 = vpop.f32.mrf.mxu0
        %v770 = vpop.f32.mrf.mxu0
        %v771 = vadd.f32 0.0, %v770
        %v772 = vpop.f32.mrf.mxu0
        %773 = vmatprep.mubr.bf16.mxu0 0
        %774 = vmatmul.mubr.bf16.gmra.mxu0 %v489
        %v775 = vpop.f32.mrf.mxu0
        %v776 = vadd.f32 0.0, %v775
        %v777 = vpop.f32.mrf.mxu0
        %v778 = vpop.f32.mrf.mxu0
        %v779 = vadd.f32 0.0, %v778
        %v780 = vpop.f32.mrf.mxu0
        %781 = vmatprep.mubr.bf16.mxu0 0
        %782 = vmatmul.mubr.bf16.gmra.mxu0 %v490
        %v783 = vpop.f32.mrf.mxu0
        %v784 = vadd.f32 0.0, %v783
        %v785 = vpop.f32.mrf.mxu0
        %v786 = vpop.f32.mrf.mxu0
        %v787 = vadd.f32 0.0, %v786
        %v788 = vpop.f32.mrf.mxu0
        %789 = vmatprep.mubr.bf16.mxu0 0
        %790 = vmatmul.mubr.bf16.gmra.mxu0 %v491
        %v791 = vpop.f32.mrf.mxu0
        %v792 = vadd.f32 0.0, %v791
        %v793 = vpop.f32.mrf.mxu0
        %v794 = vpop.f32.mrf.mxu0
        %v795 = vadd.f32 0.0, %v794
        %v796 = vpop.f32.mrf.mxu0
        %797 = vmatprep.mubr.bf16.mxu0 0
        %798 = vmatmul.mubr.bf16.gmra.mxu0 %v492
        %v799 = vpop.f32.mrf.mxu0
        %v800 = vadd.f32 0.0, %v799
        %v801 = vpop.f32.mrf.mxu0
        %v802 = vpop.f32.mrf.mxu0
        %v803 = vadd.f32 0.0, %v802
        %v804 = vpop.f32.mrf.mxu0
        %805 = vmatprep.mubr.bf16.mxu0 0
        %806 = vmatmul.mubr.bf16.gmra.mxu0 %v493
        %v807 = vpop.f32.mrf.mxu0
        %v808 = vadd.f32 0.0, %v807
        %v809 = vpop.f32.mrf.mxu0
        %v810 = vpop.f32.mrf.mxu0
        %v811 = vadd.f32 0.0, %v810
        %v812 = vpop.f32.mrf.mxu0
        %813 = vmatprep.mubr.bf16.mxu0 0
        %814 = vmatmul.mubr.bf16.gmra.mxu0 %v494
        %v815 = vpop.f32.mrf.mxu0
        %v816 = vadd.f32 0.0, %v815
        %v817 = vpop.f32.mrf.mxu0
        %v818 = vpop.f32.mrf.mxu0
        %v819 = vadd.f32 0.0, %v818
        %v820 = vpop.f32.mrf.mxu0
        %821 = vmatprep.mubr.bf16.mxu0 0
        %822 = vmatmul.mubr.bf16.gmra.mxu0 %v495
        %v823 = vpop.f32.mrf.mxu0
        %v824 = vadd.f32 0.0, %v823
        %v825 = vpop.f32.mrf.mxu0
        %v826 = vpop.f32.mrf.mxu0
        %v827 = vadd.f32 0.0, %v826
        %v828 = vpop.f32.mrf.mxu0
        %829 = vmatprep.mubr.bf16.mxu0 0
        %830 = vmatmul.mubr.bf16.gmra.mxu0 %v496
        %v831 = vpop.f32.mrf.mxu0
        %v832 = vadd.f32 0.0, %v831
        %v833 = vpop.f32.mrf.mxu0
        %v834 = vpop.f32.mrf.mxu0
        %v835 = vadd.f32 0.0, %v834
        %v836 = vpop.f32.mrf.mxu0
        %837 = vmatprep.mubr.bf16.mxu0 0
        %838 = vmatmul.mubr.bf16.gmra.mxu0 %v497
        %v839 = vpop.f32.mrf.mxu0
        %v840 = vadd.f32 0.0, %v839
        %v841 = vpop.f32.mrf.mxu0
        %v842 = vpop.f32.mrf.mxu0
        %v843 = vadd.f32 0.0, %v842
        %v844 = vpop.f32.mrf.mxu0
        %845 = vmatprep.mubr.bf16.mxu0 0
        %846 = vmatmul.mubr.bf16.gmra.mxu0 %v498
        %v847 = vpop.f32.mrf.mxu0
        %v848 = vadd.f32 0.0, %v847
        %v849 = vpop.f32.mrf.mxu0
        %v850 = vpop.f32.mrf.mxu0
        %v851 = vadd.f32 0.0, %v850
        %v852 = vpop.f32.mrf.mxu0
        %853 = vmatprep.mubr.bf16.mxu0 0
        %854 = vmatmul.mubr.bf16.gmra.mxu0 %v499
        %v855 = vpop.f32.mrf.mxu0
        %v856 = vadd.f32 0.0, %v855
        %v857 = vpop.f32.mrf.mxu0
        %v858 = vpop.f32.mrf.mxu0
        %v859 = vadd.f32 0.0, %v858
        %v860 = vpop.f32.mrf.mxu0
        %861 = vmatprep.mubr.bf16.mxu0 0
        %862 = vmatmul.mubr.bf16.gmra.mxu0 %v500
        %v863 = vpop.f32.mrf.mxu0
        %v864 = vadd.f32 0.0, %v863
        %v865 = vpop.f32.mrf.mxu0
        %v866 = vpop.f32.mrf.mxu0
        %v867 = vadd.f32 0.0, %v866
        %v868 = vpop.f32.mrf.mxu0
        %869 = vdwg.mxu0
        %v870 = vpack.c.bf16 %v619, %v616
        %v871 = vpack.c.bf16 %v627, %v624
        %v872 = vpack.c.bf16 %v635, %v632
        %v873 = vpack.c.bf16 %v643, %v640
        %v874 = vpack.c.bf16 %v651, %v648
        %v875 = vpack.c.bf16 %v659, %v656
        %v876 = vpack.c.bf16 %v667, %v664
        %v877 = vpack.c.bf16 %v675, %v672
        %v878 = vpack.c.bf16 %v683, %v680
        %v879 = vpack.c.bf16 %v691, %v688
        %v880 = vpack.c.bf16 %v699, %v696
        %v881 = vpack.c.bf16 %v707, %v704
        %v882 = vpack.c.bf16 %v715, %v712
        %v883 = vpack.c.bf16 %v723, %v720
        %v884 = vpack.c.bf16 %v731, %v728
        %v885 = vpack.c.bf16 %v739, %v736
        %v886 = vpack.c.bf16 %v747, %v744
        %v887 = vpack.c.bf16 %v755, %v752
        %v888 = vpack.c.bf16 %v763, %v760
        %v889 = vpack.c.bf16 %v771, %v768
        %v890 = vpack.c.bf16 %v779, %v776
        %v891 = vpack.c.bf16 %v787, %v784
        %v892 = vpack.c.bf16 %v795, %v792
        %v893 = vpack.c.bf16 %v803, %v800
        %v894 = vpack.c.bf16 %v811, %v808
        %v895 = vpack.c.bf16 %v819, %v816
        %v896 = vpack.c.bf16 %v827, %v824
        %v897 = vpack.c.bf16 %v835, %v832
        %v898 = vpack.c.bf16 %v843, %v840
        %v899 = vpack.c.bf16 %v851, %v848
        %v900 = vpack.c.bf16 %v859, %v856
        %v901 = vpack.c.bf16 %v867, %v864
        %v934 = vunpack.c.l.b16 %v870
        %v935 = vunpack.c.h.b16 %v870
        %v936 = vunpack.c.l.b16 %v871
        %v937 = vunpack.c.h.b16 %v871
        %v938 = vunpack.c.l.b16 %v872
        %v939 = vunpack.c.h.b16 %v872
        %v940 = vunpack.c.l.b16 %v873
        %v941 = vunpack.c.h.b16 %v873
        %v942 = vunpack.c.l.b16 %v874
        %v943 = vunpack.c.h.b16 %v874
        %v944 = vunpack.c.l.b16 %v875
        %v945 = vunpack.c.h.b16 %v875
        %v946 = vunpack.c.l.b16 %v876
        %v947 = vunpack.c.h.b16 %v876
        %v948 = vunpack.c.l.b16 %v877
        %v949 = vunpack.c.h.b16 %v877
        %v950 = vunpack.c.l.b16 %v878
        %v951 = vunpack.c.h.b16 %v878
        %v952 = vunpack.c.l.b16 %v879
        %v953 = vunpack.c.h.b16 %v879
        %v954 = vunpack.c.l.b16 %v880
        %v955 = vunpack.c.h.b16 %v880
        %v956 = vunpack.c.l.b16 %v881
        %v957 = vunpack.c.h.b16 %v881
        %v958 = vunpack.c.l.b16 %v882
        %v959 = vunpack.c.h.b16 %v882
        %v960 = vunpack.c.l.b16 %v883
        %v961 = vunpack.c.h.b16 %v883
        %v962 = vunpack.c.l.b16 %v884
        %v963 = vunpack.c.h.b16 %v884
        %v964 = vunpack.c.l.b16 %v885
        %v965 = vunpack.c.h.b16 %v885
        %v966 = vunpack.c.l.b16 %v886
        %v967 = vunpack.c.h.b16 %v886
        %v968 = vunpack.c.l.b16 %v887
        %v969 = vunpack.c.h.b16 %v887
        %v970 = vunpack.c.l.b16 %v888
        %v971 = vunpack.c.h.b16 %v888
        %v972 = vunpack.c.l.b16 %v889
        %v973 = vunpack.c.h.b16 %v889
        %v974 = vunpack.c.l.b16 %v890
        %v975 = vunpack.c.h.b16 %v890
        %v976 = vunpack.c.l.b16 %v891
        %v977 = vunpack.c.h.b16 %v891
        %v978 = vunpack.c.l.b16 %v892
        %v979 = vunpack.c.h.b16 %v892
        %v980 = vunpack.c.l.b16 %v893
        %v981 = vunpack.c.h.b16 %v893
        %v982 = vunpack.c.l.b16 %v894
        %v983 = vunpack.c.h.b16 %v894
        %v984 = vunpack.c.l.b16 %v895
        %v985 = vunpack.c.h.b16 %v895
        %v986 = vunpack.c.l.b16 %v896
        %v987 = vunpack.c.h.b16 %v896
        %v988 = vunpack.c.l.b16 %v897
        %v989 = vunpack.c.h.b16 %v897
        %v990 = vunpack.c.l.b16 %v898
        %v991 = vunpack.c.h.b16 %v898
        %v992 = vunpack.c.l.b16 %v899
        %v993 = vunpack.c.h.b16 %v899
        %v994 = vunpack.c.l.b16 %v900
        %v995 = vunpack.c.h.b16 %v900
        %v996 = vunpack.c.l.b16 %v901
        %v997 = vunpack.c.h.b16 %v901
        %v998 = vpack.c.b16 %v934, %v934
        %v999 = vpack.c.b16 %v935, %v935
        %v1000 = vpack.c.b16 %v936, %v936
        %v1001 = vpack.c.b16 %v937, %v937
        %v1002 = vpack.c.b16 %v938, %v938
        %v1003 = vpack.c.b16 %v939, %v939
        %v1004 = vpack.c.b16 %v940, %v940
        %v1005 = vpack.c.b16 %v941, %v941
        %v1006 = vpack.c.b16 %v942, %v942
        %v1007 = vpack.c.b16 %v943, %v943
        %v1008 = vpack.c.b16 %v944, %v944
        %v1009 = vpack.c.b16 %v945, %v945
        %v1010 = vpack.c.b16 %v946, %v946
        %v1011 = vpack.c.b16 %v947, %v947
        %v1012 = vpack.c.b16 %v948, %v948
        %v1013 = vpack.c.b16 %v949, %v949
        %v1014 = vpack.c.b16 %v950, %v950
        %v1015 = vpack.c.b16 %v951, %v951
        %v1016 = vpack.c.b16 %v952, %v952
        %v1017 = vpack.c.b16 %v953, %v953
        %v1018 = vpack.c.b16 %v954, %v954
        %v1019 = vpack.c.b16 %v955, %v955
        %v1020 = vpack.c.b16 %v956, %v956
        %v1021 = vpack.c.b16 %v957, %v957
        %v1022 = vpack.c.b16 %v958, %v958
        %v1023 = vpack.c.b16 %v959, %v959
        %v1024 = vpack.c.b16 %v960, %v960
        %v1025 = vpack.c.b16 %v961, %v961
        %v1026 = vpack.c.b16 %v962, %v962
        %v1027 = vpack.c.b16 %v963, %v963
        %v1028 = vpack.c.b16 %v964, %v964
        %v1029 = vpack.c.b16 %v965, %v965
        %v1030 = vpack.c.b16 %v966, %v966
        %v1031 = vpack.c.b16 %v967, %v967
        %v1032 = vpack.c.b16 %v968, %v968
        %v1033 = vpack.c.b16 %v969, %v969
        %v1034 = vpack.c.b16 %v970, %v970
        %v1035 = vpack.c.b16 %v971, %v971
        %v1036 = vpack.c.b16 %v972, %v972
        %v1037 = vpack.c.b16 %v973, %v973
        %v1038 = vpack.c.b16 %v974, %v974
        %v1039 = vpack.c.b16 %v975, %v975
        %v1040 = vpack.c.b16 %v976, %v976
        %v1041 = vpack.c.b16 %v977, %v977
        %v1042 = vpack.c.b16 %v978, %v978
        %v1043 = vpack.c.b16 %v979, %v979
        %v1044 = vpack.c.b16 %v980, %v980
        %v1045 = vpack.c.b16 %v981, %v981
        %v1046 = vpack.c.b16 %v982, %v982
        %v1047 = vpack.c.b16 %v983, %v983
        %v1048 = vpack.c.b16 %v984, %v984
        %v1049 = vpack.c.b16 %v985, %v985
        %v1050 = vpack.c.b16 %v986, %v986
        %v1051 = vpack.c.b16 %v987, %v987
        %v1052 = vpack.c.b16 %v988, %v988
        %v1053 = vpack.c.b16 %v989, %v989
        %v1054 = vpack.c.b16 %v990, %v990
        %v1055 = vpack.c.b16 %v991, %v991
        %v1056 = vpack.c.b16 %v992, %v992
        %v1057 = vpack.c.b16 %v993, %v993
        %v1058 = vpack.c.b16 %v994, %v994
        %v1059 = vpack.c.b16 %v995, %v995
        %v1060 = vpack.c.b16 %v996, %v996
        %v1061 = vpack.c.b16 %v997, %v997
        %1126 = vst [vmem:[%s253] sm:$0xf] %v998
        %1127 = vst [vmem:[%s253 + $0x4] sm:$0xf] %v999
        %1128 = vst [vmem:[%s253 + $0x8] sm:$0xf] %v1000
        %1129 = vst [vmem:[%s253 + $0xc] sm:$0xf] %v1001
        %1130 = vst [vmem:[%s253 + $0x10] sm:$0xf] %v1002
        %1131 = vst [vmem:[%s253 + $0x14] sm:$0xf] %v1003
        %1132 = vst [vmem:[%s253 + $0x18] sm:$0xf] %v1004
        %1133 = vst [vmem:[%s253 + $0x1c] sm:$0xf] %v1005
        %1134 = vst [vmem:[%s253 + $0x20] sm:$0xf] %v1006
        %1135 = vst [vmem:[%s253 + $0x24] sm:$0xf] %v1007
        %1136 = vst [vmem:[%s253 + $0x28] sm:$0xf] %v1008
        %1137 = vst [vmem:[%s253 + $0x2c] sm:$0xf] %v1009
        %1138 = vst [vmem:[%s253 + $0x30] sm:$0xf] %v1010
        %1139 = vst [vmem:[%s253 + $0x34] sm:$0xf] %v1011
        %1140 = vst [vmem:[%s253 + $0x38] sm:$0xf] %v1012
        %1141 = vst [vmem:[%s253 + $0x3c] sm:$0xf] %v1013
        %1142 = vst [vmem:[%s253 + $0x40] sm:$0xf] %v1014
        %1143 = vst [vmem:[%s253 + $0x44] sm:$0xf] %v1015
        %1144 = vst [vmem:[%s253 + $0x48] sm:$0xf] %v1016
        %1145 = vst [vmem:[%s253 + $0x4c] sm:$0xf] %v1017
        %1146 = vst [vmem:[%s253 + $0x50] sm:$0xf] %v1018
        %1147 = vst [vmem:[%s253 + $0x54] sm:$0xf] %v1019
        %1148 = vst [vmem:[%s253 + $0x58] sm:$0xf] %v1020
        %1149 = vst [vmem:[%s253 + $0x5c] sm:$0xf] %v1021
        %1150 = vst [vmem:[%s253 + $0x60] sm:$0xf] %v1022
        %1151 = vst [vmem:[%s253 + $0x64] sm:$0xf] %v1023
        %1152 = vst [vmem:[%s253 + $0x68] sm:$0xf] %v1024
        %1153 = vst [vmem:[%s253 + $0x6c] sm:$0xf] %v1025
        %1154 = vst [vmem:[%s253 + $0x70] sm:$0xf] %v1026
        %1155 = vst [vmem:[%s253 + $0x74] sm:$0xf] %v1027
        %1156 = vst [vmem:[%s253 + $0x78] sm:$0xf] %v1028
        %1157 = vst [vmem:[%s253 + $0x7c] sm:$0xf] %v1029
        %1158 = vst [vmem:[%s253 + $0x80] sm:$0xf] %v1030
        %1159 = vst [vmem:[%s253 + $0x84] sm:$0xf] %v1031
        %1160 = vst [vmem:[%s253 + $0x88] sm:$0xf] %v1032
        %1161 = vst [vmem:[%s253 + $0x8c] sm:$0xf] %v1033
        %1162 = vst [vmem:[%s253 + $0x90] sm:$0xf] %v1034
        %1163 = vst [vmem:[%s253 + $0x94] sm:$0xf] %v1035
        %1164 = vst [vmem:[%s253 + $0x98] sm:$0xf] %v1036
        %1165 = vst [vmem:[%s253 + $0x9c] sm:$0xf] %v1037
        %1166 = vst [vmem:[%s253 + $0xa0] sm:$0xf] %v1038
        %1167 = vst [vmem:[%s253 + $0xa4] sm:$0xf] %v1039
        %1168 = vst [vmem:[%s253 + $0xa8] sm:$0xf] %v1040
        %1169 = vst [vmem:[%s253 + $0xac] sm:$0xf] %v1041
        %1170 = vst [vmem:[%s253 + $0xb0] sm:$0xf] %v1042
        %1171 = vst [vmem:[%s253 + $0xb4] sm:$0xf] %v1043
        %1172 = vst [vmem:[%s253 + $0xb8] sm:$0xf] %v1044
        %1173 = vst [vmem:[%s253 + $0xbc] sm:$0xf] %v1045
        %1174 = vst [vmem:[%s253 + $0xc0] sm:$0xf] %v1046
        %1175 = vst [vmem:[%s253 + $0xc4] sm:$0xf] %v1047
        %1176 = vst [vmem:[%s253 + $0xc8] sm:$0xf] %v1048
        %1177 = vst [vmem:[%s253 + $0xcc] sm:$0xf] %v1049
        %1178 = vst [vmem:[%s253 + $0xd0] sm:$0xf] %v1050
        %1179 = vst [vmem:[%s253 + $0xd4] sm:$0xf] %v1051
        %1180 = vst [vmem:[%s253 + $0xd8] sm:$0xf] %v1052
        %1181 = vst [vmem:[%s253 + $0xdc] sm:$0xf] %v1053
        %1182 = vst [vmem:[%s253 + $0xe0] sm:$0xf] %v1054
        %1183 = vst [vmem:[%s253 + $0xe4] sm:$0xf] %v1055
        %1184 = vst [vmem:[%s253 + $0xe8] sm:$0xf] %v1056
        %1185 = vst [vmem:[%s253 + $0xec] sm:$0xf] %v1057
        %1186 = vst [vmem:[%s253 + $0xf0] sm:$0xf] %v1058
        %1187 = vst [vmem:[%s253 + $0xf4] sm:$0xf] %v1059
        %1188 = vst [vmem:[%s253 + $0xf8] sm:$0xf] %v1060
        %1189 = vst [vmem:[%s253 + $0xfc] sm:$0xf] %v1061
        %p1190 = scmp.eq.s32.totalorder %s29, 0
        // Predicated region
        $region37: #{tpu_custom_call.1} parent=27 // pred_check
          %p1191 = pneg %p1190
        $region38: #{tpu_custom_call.1} parent=27 // pred_check_branch
          %1193 = sbr.rel (%p1191) target = $region40
        $region39: #{tpu_custom_call.1} parent=27 // pred_region
          %1194 = vst [vmem:[#allocation8] sm:$0x1] 0.0
          %1195 = vst [vmem:[#allocation10] sm:$0x1] 0.0
        $region40: #{tpu_custom_call.1} parent=27 // pred_fallthru
          _
        %v1196 = vld [vmem:[#allocation8] sm:$0x1]
        %v1197 = vadd.f32 %v616, %v619
        %v1198 = vadd.f32 %v1197, %v624
        %v1199 = vadd.f32 %v1198, %v627
        %v1200 = vadd.f32 %v1199, %v632
        %v1201 = vadd.f32 %v1200, %v635
        %v1202 = vadd.f32 %v1201, %v640
        %v1203 = vadd.f32 %v1202, %v643
        %v1204 = vadd.f32 %v1203, %v648
        %v1205 = vadd.f32 %v1204, %v651
        %v1206 = vadd.f32 %v1205, %v656
        %v1207 = vadd.f32 %v1206, %v659
        %v1208 = vadd.f32 %v1207, %v664
        %v1209 = vadd.f32 %v1208, %v667
        %v1210 = vadd.f32 %v1209, %v672
        %v1211 = vadd.f32 %v1210, %v675
        %v1212 = vadd.f32 %v1211, %v680
        %v1213 = vadd.f32 %v1212, %v683
        %v1214 = vadd.f32 %v1213, %v688
        %v1215 = vadd.f32 %v1214, %v691
        %v1216 = vadd.f32 %v1215, %v696
        %v1217 = vadd.f32 %v1216, %v699
        %v1218 = vadd.f32 %v1217, %v704
        %v1219 = vadd.f32 %v1218, %v707
        %v1220 = vadd.f32 %v1219, %v712
        %v1221 = vadd.f32 %v1220, %v715
        %v1222 = vadd.f32 %v1221, %v720
        %v1223 = vadd.f32 %v1222, %v723
        %v1224 = vadd.f32 %v1223, %v728
        %v1225 = vadd.f32 %v1224, %v731
        %v1226 = vadd.f32 %v1225, %v736
        %v1227 = vadd.f32 %v1226, %v739
        %v1228 = vadd.f32 %v1227, %v744
        %v1229 = vadd.f32 %v1228, %v747
        %v1230 = vadd.f32 %v1229, %v752
        %v1231 = vadd.f32 %v1230, %v755
        %v1232 = vadd.f32 %v1231, %v760
        %v1233 = vadd.f32 %v1232, %v763
        %v1234 = vadd.f32 %v1233, %v768
        %v1235 = vadd.f32 %v1234, %v771
        %v1236 = vadd.f32 %v1235, %v776
        %v1237 = vadd.f32 %v1236, %v779
        %v1238 = vadd.f32 %v1237, %v784
        %v1239 = vadd.f32 %v1238, %v787
        %v1240 = vadd.f32 %v1239, %v792
        %v1241 = vadd.f32 %v1240, %v795
        %v1242 = vadd.f32 %v1241, %v800
        %v1243 = vadd.f32 %v1242, %v803
        %v1244 = vadd.f32 %v1243, %v808
        %v1245 = vadd.f32 %v1244, %v811
        %v1246 = vadd.f32 %v1245, %v816
        %v1247 = vadd.f32 %v1246, %v819
        %v1248 = vadd.f32 %v1247, %v824
        %v1249 = vadd.f32 %v1248, %v827
        %v1250 = vadd.f32 %v1249, %v832
        %v1251 = vadd.f32 %v1250, %v835
        %v1252 = vadd.f32 %v1251, %v840
        %v1253 = vadd.f32 %v1252, %v843
        %v1254 = vadd.f32 %v1253, %v848
        %v1255 = vadd.f32 %v1254, %v851
        %v1256 = vadd.f32 %v1255, %v856
        %v1257 = vadd.f32 %v1256, %v859
        %v1258 = vadd.f32 %v1257, %v864
        %v1259 = vadd.f32 %v1258, %v867
        %v1260 = vrot.slane %v1259, 4
        %v1261 = vadd.f32 %v1259, %v1260
        %v1262 = vrot.slane %v1261, 2
        %v1263 = vadd.f32 %v1261, %v1262
        %v1264 = vrot.slane %v1263, 1
        %v1265 = vadd.f32 %v1263, %v1264
        %v1266 = vadd.f32 %v1196, %v1265
        %1267 = vst [vmem:[#allocation8] sm:$0x1] %v1266
        %v1268 = vld [vmem:[#allocation10] sm:$0x1]
        %v1269 = vmul.f32 %v616, %v616
        %v1270 = vmul.f32 %v619, %v619
        %v1271 = vmul.f32 %v624, %v624
        %v1272 = vmul.f32 %v627, %v627
        %v1273 = vmul.f32 %v632, %v632
        %v1274 = vmul.f32 %v635, %v635
        %v1275 = vmul.f32 %v640, %v640
        %v1276 = vmul.f32 %v643, %v643
        %v1277 = vmul.f32 %v648, %v648
        %v1278 = vmul.f32 %v651, %v651
        %v1279 = vmul.f32 %v656, %v656
        %v1280 = vmul.f32 %v659, %v659
        %v1281 = vmul.f32 %v664, %v664
        %v1282 = vmul.f32 %v667, %v667
        %v1283 = vmul.f32 %v672, %v672
        %v1284 = vmul.f32 %v675, %v675
        %v1285 = vmul.f32 %v680, %v680
        %v1286 = vmul.f32 %v683, %v683
        %v1287 = vmul.f32 %v688, %v688
        %v1288 = vmul.f32 %v691, %v691
        %v1289 = vmul.f32 %v696, %v696
        %v1290 = vmul.f32 %v699, %v699
        %v1291 = vmul.f32 %v704, %v704
        %v1292 = vmul.f32 %v707, %v707
        %v1293 = vmul.f32 %v712, %v712
        %v1294 = vmul.f32 %v715, %v715
        %v1295 = vmul.f32 %v720, %v720
        %v1296 = vmul.f32 %v723, %v723
        %v1297 = vmul.f32 %v728, %v728
        %v1298 = vmul.f32 %v731, %v731
        %v1299 = vmul.f32 %v736, %v736
        %v1300 = vmul.f32 %v739, %v739
        %v1301 = vmul.f32 %v744, %v744
        %v1302 = vmul.f32 %v747, %v747
        %v1303 = vmul.f32 %v752, %v752
        %v1304 = vmul.f32 %v755, %v755
        %v1305 = vmul.f32 %v760, %v760
        %v1306 = vmul.f32 %v763, %v763
        %v1307 = vmul.f32 %v768, %v768
        %v1308 = vmul.f32 %v771, %v771
        %v1309 = vmul.f32 %v776, %v776
        %v1310 = vmul.f32 %v779, %v779
        %v1311 = vmul.f32 %v784, %v784
        %v1312 = vmul.f32 %v787, %v787
        %v1313 = vmul.f32 %v792, %v792
        %v1314 = vmul.f32 %v795, %v795
        %v1315 = vmul.f32 %v800, %v800
        %v1316 = vmul.f32 %v803, %v803
        %v1317 = vmul.f32 %v808, %v808
        %v1318 = vmul.f32 %v811, %v811
        %v1319 = vmul.f32 %v816, %v816
        %v1320 = vmul.f32 %v819, %v819
        %v1321 = vmul.f32 %v824, %v824
        %v1322 = vmul.f32 %v827, %v827
        %v1323 = vmul.f32 %v832, %v832
        %v1324 = vmul.f32 %v835, %v835
        %v1325 = vmul.f32 %v840, %v840
        %v1326 = vmul.f32 %v843, %v843
        %v1327 = vmul.f32 %v848, %v848
        %v1328 = vmul.f32 %v851, %v851
        %v1329 = vmul.f32 %v856, %v856
        %v1330 = vmul.f32 %v859, %v859
        %v1331 = vmul.f32 %v864, %v864
        %v1332 = vmul.f32 %v867, %v867
        %v1333 = vadd.f32 %v1269, %v1270
        %v1334 = vadd.f32 %v1333, %v1271
        %v1335 = vadd.f32 %v1334, %v1272
        %v1336 = vadd.f32 %v1335, %v1273
        %v1337 = vadd.f32 %v1336, %v1274
        %v1338 = vadd.f32 %v1337, %v1275
        %v1339 = vadd.f32 %v1338, %v1276
        %v1340 = vadd.f32 %v1339, %v1277
        %v1341 = vadd.f32 %v1340, %v1278
        %v1342 = vadd.f32 %v1341, %v1279
        %v1343 = vadd.f32 %v1342, %v1280
        %v1344 = vadd.f32 %v1343, %v1281
        %v1345 = vadd.f32 %v1344, %v1282
        %v1346 = vadd.f32 %v1345, %v1283
        %v1347 = vadd.f32 %v1346, %v1284
        %v1348 = vadd.f32 %v1347, %v1285
        %v1349 = vadd.f32 %v1348, %v1286
        %v1350 = vadd.f32 %v1349, %v1287
        %v1351 = vadd.f32 %v1350, %v1288
        %v1352 = vadd.f32 %v1351, %v1289
        %v1353 = vadd.f32 %v1352, %v1290
        %v1354 = vadd.f32 %v1353, %v1291
        %v1355 = vadd.f32 %v1354, %v1292
        %v1356 = vadd.f32 %v1355, %v1293
        %v1357 = vadd.f32 %v1356, %v1294
        %v1358 = vadd.f32 %v1357, %v1295
        %v1359 = vadd.f32 %v1358, %v1296
        %v1360 = vadd.f32 %v1359, %v1297
        %v1361 = vadd.f32 %v1360, %v1298
        %v1362 = vadd.f32 %v1361, %v1299
        %v1363 = vadd.f32 %v1362, %v1300
        %v1364 = vadd.f32 %v1363, %v1301
        %v1365 = vadd.f32 %v1364, %v1302
        %v1366 = vadd.f32 %v1365, %v1303
        %v1367 = vadd.f32 %v1366, %v1304
        %v1368 = vadd.f32 %v1367, %v1305
        %v1369 = vadd.f32 %v1368, %v1306
        %v1370 = vadd.f32 %v1369, %v1307
        %v1371 = vadd.f32 %v1370, %v1308
        %v1372 = vadd.f32 %v1371, %v1309
        %v1373 = vadd.f32 %v1372, %v1310
        %v1374 = vadd.f32 %v1373, %v1311
        %v1375 = vadd.f32 %v1374, %v1312
        %v1376 = vadd.f32 %v1375, %v1313
        %v1377 = vadd.f32 %v1376, %v1314
        %v1378 = vadd.f32 %v1377, %v1315
        %v1379 = vadd.f32 %v1378, %v1316
        %v1380 = vadd.f32 %v1379, %v1317
        %v1381 = vadd.f32 %v1380, %v1318
        %v1382 = vadd.f32 %v1381, %v1319
        %v1383 = vadd.f32 %v1382, %v1320
        %v1384 = vadd.f32 %v1383, %v1321
        %v1385 = vadd.f32 %v1384, %v1322
        %v1386 = vadd.f32 %v1385, %v1323
        %v1387 = vadd.f32 %v1386, %v1324
        %v1388 = vadd.f32 %v1387, %v1325
        %v1389 = vadd.f32 %v1388, %v1326
        %v1390 = vadd.f32 %v1389, %v1327
        %v1391 = vadd.f32 %v1390, %v1328
        %v1392 = vadd.f32 %v1391, %v1329
        %v1393 = vadd.f32 %v1392, %v1330
        %v1394 = vadd.f32 %v1393, %v1331
        %v1395 = vadd.f32 %v1394, %v1332
        %v1396 = vrot.slane %v1395, 4
        %v1397 = vadd.f32 %v1395, %v1396
        %v1398 = vrot.slane %v1397, 2
        %v1399 = vadd.f32 %v1397, %v1398
        %v1400 = vrot.slane %v1399, 1
        %v1401 = vadd.f32 %v1399, %v1400
        %v1402 = vadd.f32 %v1268, %v1401
        %1403 = vst [vmem:[#allocation10] sm:$0x1] %v1402
        %s1404 = sand.u32 %s98, 1
        %s1405 = scalar_lea.sflag [#allocation4], %s1404
        %s1406 = sand.u32 %s98, 1
        %s1407 = smul.addr %s1406, 256
        %s1408 = scalar_lea.vmem [#allocation7], %s1407
        // Predicated region
        $region41: #{tpu_custom_call.1} parent=27 // pred_check
          %p1409 = pneg %p108
        $region42: #{tpu_custom_call.1} parent=27 // pred_check_branch
          %1411 = sbr.rel (%p1409) target = $region44
        $region43: #{tpu_custom_call.1} parent=27 // pred_region
          %s1412 = smul.u32 64, %s29
          %s1414 = ssub.s32 4096, 4096
          %1415 = vsyncadd %s1405, %s1414
          %s1416 = sadd.s32 %s28, %s1412
          %s1417 = smul.addr %s1416, 64
          %s1418 = scalar_lea.hbm %s2, %s1417
          %s1419 = sshll.u32 %s1408, 4
          %s1420 = int_to_ptr.vmem [resolvable:$true] %s1419
          %1425 = dma.vmem_to_hbm [thread:$0]  %s1420, 4096, %s1418, %s1405, 64, 64, 4
        $region44: #{tpu_custom_call.1} parent=27 // pred_fallthru
          _
        // Predicated region
        $region45: #{tpu_custom_call.1} parent=27 // pred_check
          %p1426 = pneg %p134
        $region46: #{tpu_custom_call.1} parent=27 // pred_check_branch
          %1428 = sbr.rel (%p1426) target = $region48
        $region47: #{tpu_custom_call.1} parent=27 // pred_region
          %s1430 = ssub.s32 16, 16
          %1431 = vsyncadd [#allocation9], %s1430
          %s1432 = smul.addr %s28, 16
          %s1433 = scalar_lea.hbm %s3, %s1432
          %s1435 = sshll.u32 [#allocation8], 4
          %s1436 = int_to_ptr.vmem [resolvable:$true] %s1435
          %1438 = dma.vmem_to_hbm [thread:$0]  %s1436, 16, %s1433, [#allocation9]
        $region48: #{tpu_custom_call.1} parent=27 // pred_fallthru
          _
        // Predicated region
        $region49: #{tpu_custom_call.1} parent=27 // pred_check
          %p1439 = pneg %p160
        $region50: #{tpu_custom_call.1} parent=27 // pred_check_branch
          %1441 = sbr.rel (%p1439) target = $region52
        $region51: #{tpu_custom_call.1} parent=27 // pred_region
          %s1443 = ssub.s32 16, 16
          %1444 = vsyncadd [#allocation9], %s1443
          %s1445 = smul.addr %s28, 16
          %s1446 = scalar_lea.hbm %s4, %s1445
          %s1448 = sshll.u32 [#allocation10], 4
          %s1449 = int_to_ptr.vmem [resolvable:$true] %s1448
          %1451 = dma.vmem_to_hbm [thread:$0]  %s1449, 16, %s1446, [#allocation9]
        $region52: #{tpu_custom_call.1} parent=27 // pred_fallthru
          _
        // Predicated region
        $region53: #{tpu_custom_call.1} parent=27 // pred_check
          %p1452 = pneg %p134
        $region54: #{tpu_custom_call.1} parent=27 // pred_check_branch
          %1454 = sbr.rel (%p1452) target = $region56
        $region55: #{tpu_custom_call.1} parent=27 // pred_region
          %1455 = dma.done [#allocation9], 16
        $region56: #{tpu_custom_call.1} parent=27 // pred_fallthru
          _
        // Predicated region
        $region57: #{tpu_custom_call.1} parent=27 // pred_check
          %p1456 = pneg %p160
        $region58: #{tpu_custom_call.1} parent=27 // pred_check_branch
          %1458 = sbr.rel (%p1456) target = $region60
        $region59: #{tpu_custom_call.1} parent=27 // pred_region
          %1459 = dma.done [#allocation9], 16
        $region60: #{tpu_custom_call.1} parent=27 // pred_fallthru
          _
      $region28: #{tpu_custom_call.1} parent=5 // pred_fallthru
        _
      %p1460 = scmp.le.s32.totalorder 2, %s19
      // Predicated region
      $region61: #{tpu_custom_call.1} parent=5 // pred_check
        %p1461 = pneg %p1460
      $region62: #{tpu_custom_call.1} parent=5 // pred_check_branch
        %1463 = sbr.rel (%p1461) target = $region64
      $region63: #{tpu_custom_call.1} parent=5 // pred_region
        %s1464 = ssub.s32 %s19, 2
        // Predicated region
        $region65: #{tpu_custom_call.1} parent=63 // pred_check
          %p1465 = pneg %p114
        $region66: #{tpu_custom_call.1} parent=63 // pred_check_branch
          %1467 = sbr.rel (%p1465) target = $region68
        $region67: #{tpu_custom_call.1} parent=63 // pred_region
          %s1468 = sand.u32 %s99, 1
          %s1469 = scalar_lea.sflag [#allocation4], %s1468
          %s1470 = sand.u32 %s99, 1
          %s1471 = smul.addr %s1470, 256
          %s1472 = scalar_lea.vmem [#allocation7], %s1471
          %1473 = dma.done %s1469, 4096
        $region68: #{tpu_custom_call.1} parent=63 // pred_fallthru
          _
      $region64: #{tpu_custom_call.1} parent=5 // pred_fallthru
        _
    $region6: #{tpu_custom_call.1} parent=1 // loop_footer
      %s23 = sadd.s32 1, %s19
    $region7: #{tpu_custom_call.1} parent=1 // loop_footer_branch
      %18 = sbr.rel target = $region3
    $region8: #{tpu_custom_call.1} parent=1 // loop_exit
      _
    %1474 = vsyncpa [#allocation3], 1
    %s1475 = scalar_lea.sflag [#allocation3], 1
    %1476 = vsyncpa %s1475, 1
    %1477 = vsyncpa [#allocation6], 1
    %1478 = vsyncpa [#allocation4], 1
    %s1479 = scalar_lea.sflag [#allocation4], 1
    %1480 = vsyncpa %s1479, 1
    %1481 = vsyncpa [#allocation9], 1

</llo_original>
